<compile_context>
chip_gen: v7x
topology: tpu7x:2x2x1
jax: 0.10.0
libtpu: 0.0.40
codegen_flags: <defaults>
</compile_context>

<pallas_src>
import jax
import jax.numpy as jnp
from jax.experimental import pallas as pl
from jax.experimental.pallas import tpu as pltpu


def _round_up(x, m):
    return (x + m - 1) // m * m


def _cdiv(a, b):
    return (a + b - 1) // b


def _vmem_ceiling_bytes():
    """Per-generation VMEM ceiling (~80% of physical); conservative fallback is v7x-safe."""
    try:
        cap = int(pltpu.get_tpu_info().vmem_capacity_bytes)
    except Exception:
        cap = 64 << 20
    return max(16 << 20, int(cap * 0.80))


# ----------------------------- kernel bodies -------------------------------------


def _proj_cf_kernel(x_ref, w_ref, b_ref, o_ref):
    # x_ref: (1, C, tl)  channel-first activation tile (transpose fused: contract C directly)
    # w_ref: (tn, C)     nn.Linear weight slice in PyTorch (out, in) layout (no transpose)
    # b_ref: (tn, 1)     f32 bias column
    # o_ref: (1, tn, tl) channel-first output tile -> lane-dense stores over tokens
    acc = jnp.dot(w_ref[...], x_ref[0], preferred_element_type=jnp.float32)   # (tn, tl) f32
    o_ref[0] = (acc + b_ref[...]).astype(o_ref.dtype)


def _proj_tm_kernel(x_ref, w_ref, b_ref, o_ref):
    # x_ref: (1, C, tl); w_ref: (tn, C); b_ref: (1, tn) f32; o_ref: (1, tl, tn)
    # Contract C of the channel-first tile against the un-transposed (out, in) weight,
    # producing the token-major (tl, tn) block directly -> no consumer-side transpose,
    # lane-dense stores over E (only used when tn >= 128).
    acc = jax.lax.dot_general(
        x_ref[0], w_ref[...],
        dimension_numbers=(((0,), (1,)), ((), ())),
        preferred_element_type=jnp.float32)                                   # (tl, tn) f32
    o_ref[0] = (acc + b_ref[...]).astype(o_ref.dtype)


# ----------------------------- pallas_call builder -------------------------------


def _single_buffer_spec(shape, index_map, single):
    """BlockSpec; request a single pipeline buffer when the block index is constant
    over the innermost grid axis. Falls back silently if the hint is unsupported."""
    if single:
        try:
            return pl.BlockSpec(shape, index_map, pipeline_mode=pl.Buffered(1))
        except Exception:
            pass
    return pl.BlockSpec(shape, index_map)


def _projection(x_cl, weight_oi, bias, *, token_major, compute_dtype, out_dtype,
                target_tile_bytes):
    """Core fused (flatten+transpose+Linear) kernel on a (B, C, L) channel-first tensor.

    Returns (B, E, L) when token_major=False, else (B, L, E).
    """
    B, C, L = x_cl.shape
    E = weight_oi.shape[0]
    assert weight_oi.shape == (E, C)

    if compute_dtype is not None:           # bf16 halves HBM bytes on v5e/v6e/v7x alike
        x_cl = x_cl.astype(compute_dtype)
        weight_oi = weight_oi.astype(compute_dtype)
    out_dtype = x_cl.dtype if out_dtype is None else out_dtype

    if bias is None:
        bias = jnp.zeros((E,), jnp.float32)
    bias_f32 = bias.astype(jnp.float32)     # bias add stays f32 for accuracy
    bias_blk = bias_f32.reshape(1, E) if token_major else bias_f32.reshape(E, 1)

    in_isz = jnp.dtype(x_cl.dtype).itemsize
    out_isz = jnp.dtype(out_dtype).itemsize

    # --- E-axis tiling: full weight resident when small; 256-multiples preferred for
    #     large E to match the 2x256x256 MXU on v6e/v7x (128 still fine on v5e). ---
    if E <= 512 or E % 128 != 0:
        tn = E
    else:
        tn = next(t for t in (512, 256, 128) if E % t == 0)
    n_e = E // tn

    # --- Token-axis tile from a byte budget (memory-bound op => big DMAs per step),
    #     clamped by the chip's VMEM ceiling and the token count. No padding: a
    #     partial boundary tile (ragged grid) is handled by the Pallas pipeline. ---
    vmem_ceiling = _vmem_ceiling_bytes()
    per_tok = C * in_isz + tn * out_isz
    tl = max(128, (target_tile_bytes // per_tok) // 128 * 128)
    tl = min(tl, max(128, (vmem_ceiling // 3) // per_tok // 128 * 128))
    tl = min(tl, _round_up(L, 128))
    if tl >= L:
        tl = L                          # full-extent block: always legal, no pad needed
    n_l = _cdiv(L, tl)

    # v7x megacore: keep some parallel grid extent >= 2 so both TensorCores get work.
    if B == 1 and n_e == 1 and n_l == 1 and L > 256:
        tl = min(L, _round_up(_cdiv(L, 2), 128))
        n_l = _cdiv(L, tl)

    # --- Loop order: minimize redundant HBM reads for this layer's shape.
    #     l innermost -> activation re-streamed n_e times, weight fetched once per e.
    #     e innermost -> weight re-streamed n_l times, activation fetched once per l. ---
    cost_l_inner = n_e * C * L * in_isz + E * C * in_isz
    cost_e_inner = C * L * in_isz + n_l * E * C * in_isz
    l_innermost = cost_l_inner <= cost_e_inner

    x_blk = (1, C, tl)
    w_blk = (tn, C)
    b_blk = (1, tn) if token_major else (tn, 1)
    o_blk = (1, tl, tn) if token_major else (1, tn, tl)
    out_arr_shape = (B, L, E) if token_major else (B, E, L)

    if l_innermost:
        grid = (B, n_e, n_l)
        x_map = lambda b, e, l: (b, 0, l)
        w_map = lambda b, e, l: (e, 0)
        b_map = (lambda b, e, l: (0, e)) if token_major else (lambda b, e, l: (e, 0))
        o_map = (lambda b, e, l: (b, l, e)) if token_major else (lambda b, e, l: (b, e, l))
        w_single = True     # weight/bias block index constant across innermost l axis
    else:
        grid = (B, n_l, n_e)
        x_map = lambda b, l, e: (b, 0, l)
        w_map = lambda b, l, e: (e, 0)
        b_map = (lambda b, l, e: (0, e)) if token_major else (lambda b, l, e: (e, 0))
        o_map = (lambda b, l, e: (b, l, e)) if token_major else (lambda b, l, e: (b, e, l))
        w_single = False

    # --- VMEM accounting (conservative: everything double-buffered, bias lane-padded). ---
    bias_pad = 2 * _round_up(tn, 128) * 128 * 4
    vmem_need = 2 * (C * tl * in_isz + tn * tl * out_isz + tn * C * in_isz) + bias_pad
    vmem_limit = int(min(max(int(1.5 * vmem_need), 8 << 20), vmem_ceiling))

    cost = pl.CostEstimate(
        flops=int(2 * B * L * C * E),
        transcendentals=0,
        bytes_accessed=int(B * C * L * in_isz + E * C * in_isz + E * 4
                           + B * E * L * out_isz),
    )

    kernel_fn = _proj_tm_kernel if token_major else _proj_cf_kernel

    def build(use_hints):
        return pl.pallas_call(
            kernel_fn,
            out_shape=jax.ShapeDtypeStruct(out_arr_shape, out_dtype),
            grid_spec=pltpu.PrefetchScalarGridSpec(
                num_scalar_prefetch=0,
                grid=grid,
                in_specs=[
                    _single_buffer_spec(x_blk, x_map, False),
                    _single_buffer_spec(w_blk, w_map, use_hints and w_single),
                    _single_buffer_spec(b_blk, b_map, use_hints and w_single),
                ],
                out_specs=pl.BlockSpec(o_blk, o_map),
            ),
            compiler_params=pltpu.CompilerParams(
                dimension_semantics=("parallel", "parallel", "parallel"),
                vmem_limit_bytes=vmem_limit,
            ),
            cost_estimate=cost,
        )

    try:
        return build(True)(x_cl, weight_oi, bias_blk)
    except Exception:
        # Retry without the Buffered(1) single-buffer hints (older Pallas builds).
        return build(False)(x_cl, weight_oi, bias_blk)


# ----------------------------- public wrappers ------------------------------------


def token_projection_nchw(x_nchw, weight_oi, bias=None, *, compute_dtype=None,
                          out_dtype=None, target_tile_bytes=2 << 20):
    """Fused `x.flatten(2).transpose(1, 2)` + `nn.Linear(C, E)` on an NCHW tensor.

    Returns the result channel-first, shape (B, E, H, W) — the lane-dense stage layout.
    """
    B, C, H, W = x_nchw.shape
    E = weight_oi.shape[0]
    x_cl = x_nchw.reshape(B, C, H * W)      # free reshape: stays channel-first
    out = _projection(x_cl, weight_oi, bias, token_major=False,
                      compute_dtype=compute_dtype, out_dtype=out_dtype,
                      target_tile_bytes=target_tile_bytes)
    return out.reshape(B, E, H, W)


def segformer_linear_tokens(x_nchw, weight_oi, bias=None, *, compute_dtype=None,
                            out_dtype=None, target_tile_bytes=2 << 20):
    """Token-major view matching PyTorch: x.flatten(2).transpose(1,2) @ W.T + b -> (B, H*W, E)."""
    B, C, H, W = x_nchw.shape
    E = weight_oi.shape[0]
    x_cl = x_nchw.reshape(B, C, H * W)
    if E >= 128:
        # Fused in-kernel layout change: token-major (tl, tn) tiles, lane-dense over E.
        return _projection(x_cl, weight_oi, bias, token_major=True,
                           compute_dtype=compute_dtype, out_dtype=out_dtype,
                           target_tile_bytes=target_tile_bytes)
    # Small E (< 128): keep the lane-dense channel-first kernel; the tiny-E transpose is cheap.
    out_cf = _projection(x_cl, weight_oi, bias, token_major=False,
                         compute_dtype=compute_dtype, out_dtype=out_dtype,
                         target_tile_bytes=target_tile_bytes)
    return jnp.transpose(out_cf, (0, 2, 1))


# ----------------------------------- demo -----------------------------------------


if __name__ == "__main__":
    key = jax.random.PRNGKey(0)
    k1, k2, k3, k4, k5, k6 = jax.random.split(key, 6)

    # Case 1: stage-1-like tiny shapes, E < 128 -> channel-first kernel.
    B, C, H, W, E = 2, 4, 16, 16, 32
    x = jax.random.normal(k1, (B, C, H, W), dtype=jnp.float32)
    w = jax.random.normal(k2, (E, C), dtype=jnp.float32) * 0.02   # nn.Linear(C, E) weight (E, C)
    b = jax.random.normal(k3, (E,), dtype=jnp.float32) * 0.02

    out_cf = jax.block_until_ready(token_projection_nchw(x, w, b))
    ref_cf = jnp.einsum("bchw,ec->behw", x, w) + b[None, :, None, None]
    assert out_cf.shape == (B, E, H, W)
    assert jnp.allclose(out_cf, ref_cf, atol=2e-3), "channel-first projection mismatch"

    out_tok = jax.block_until_ready(segformer_linear_tokens(x, w, b))
    tokens = jnp.transpose(x.reshape(B, C, H * W), (0, 2, 1))
    ref_tok = tokens @ w.T + b
    assert out_tok.shape == (B, H * W, E)
    assert jnp.allclose(out_tok, ref_tok, atol=2e-3), "token-major projection mismatch"

    # Multi-token-tile path (force a tiny byte budget so n_l > 1).
    out_tiled = jax.block_until_ready(
        token_projection_nchw(x, w, b, target_tile_bytes=4096))
    assert jnp.allclose(out_tiled, ref_cf, atol=2e-3), "tiled projection mismatch"

    # Case 2: stage-4-like E >= 128 -> fused in-kernel transpose to token-major output.
    B2, C2, H2, W2, E2 = 2, 32, 8, 8, 256
    x2 = jax.random.normal(k4, (B2, C2, H2, W2), dtype=jnp.float32)
    w2 = jax.random.normal(k5, (E2, C2), dtype=jnp.float32) * 0.02
    b2 = jax.random.normal(k6, (E2,), dtype=jnp.float32) * 0.02
    out2 = jax.block_until_ready(segformer_linear_tokens(x2, w2, b2))
    tokens2 = jnp.transpose(x2.reshape(B2, C2, H2 * W2), (0, 2, 1))
    ref2 = tokens2 @ w2.T + b2
    assert out2.shape == (B2, H2 * W2, E2)
    assert jnp.allclose(out2, ref2, atol=5e-3), "fused token-major projection mismatch"

    # bf16 I/O (valid on v5e as well as v6e/v7x): bf16 HBM traffic, f32 acc + f32 bias.
    out_bf = jax.block_until_ready(segformer_linear_tokens(
        x, w, b, compute_dtype=jnp.bfloat16, out_dtype=jnp.bfloat16))
    assert jnp.allclose(out_bf.astype(jnp.float32), ref_tok, atol=2e-2), "bf16 path mismatch"

    print("KERNEL_OK")
</pallas_src>

<mosaic_0001>
module attributes {stable_mosaic.version = 11 : i64} {
  func.func @_proj_cf_kernel(%arg0: i32, %arg1: i32, %arg2: i32, %arg3: memref<1x4x256xf32, #tpu.memory_space<vmem>>, %arg4: memref<32x4xf32, #tpu.memory_space<vmem>>, %arg5: memref<32x1xf32, #tpu.memory_space<vmem>>, %arg6: memref<1x32x256xf32, #tpu.memory_space<vmem>>) attributes {dimension_semantics = [#tpu.dimension_semantics<parallel>, #tpu.dimension_semantics<parallel>, #tpu.dimension_semantics<parallel>], iteration_bounds = array<i64: 2, 1, 1>, scalar_prefetch = 0 : i64, scratch_operands = 0 : i64, tpu.core_type = #tpu.core_type<tc>, window_params = [{transform_indices = @transform_0, window_bounds = array<i64: 1, 4, 256>}, {pipeline_mode = #tpu.pipeline_mode<synchronous>, transform_indices = @transform_1, window_bounds = array<i64: 32, 4>}, {pipeline_mode = #tpu.pipeline_mode<synchronous>, transform_indices = @transform_2, window_bounds = array<i64: 32, 1>}, {transform_indices = @transform_3, window_bounds = array<i64: 1, 32, 256>}]} {
    %c0 = arith.constant 0 : index
    %c0_0 = arith.constant 0 : index
    %0 = vector.load %arg4[%c0, %c0_0] : memref<32x4xf32, #tpu.memory_space<vmem>>, vector<32x4xf32>
    %c0_1 = arith.constant 0 : index
    %c0_2 = arith.constant 0 : index
    %c0_3 = arith.constant 0 : index
    %1 = vector.load %arg3[%c0_1, %c0_2, %c0_3] : memref<1x4x256xf32, #tpu.memory_space<vmem>>, vector<1x4x256xf32>
    %2 = vector.shape_cast %1 : vector<1x4x256xf32> to vector<4x256xf32>
    %cst = arith.constant dense<0.000000e+00> : vector<32x256xf32>
    %3 = tpu.matmul %0, %2, %cst {dimension_numbers = #tpu.dot_dimension_numbers<[1], [0], [0], [1], [0, 0, 1, 1], [], []>} : vector<32x4xf32>, vector<4x256xf32>, vector<32x256xf32> -> vector<32x256xf32>
    %c0_4 = arith.constant 0 : index
    %c0_5 = arith.constant 0 : index
    %4 = vector.load %arg5[%c0_4, %c0_5] : memref<32x1xf32, #tpu.memory_space<vmem>>, vector<32x1xf32>
    %5 = vector.broadcast %4 : vector<32x1xf32> to vector<32x256xf32>
    %6 = arith.addf %3, %5 : vector<32x256xf32>
    %c0_6 = arith.constant 0 : index
    %c0_7 = arith.constant 0 : index
    %c0_8 = arith.constant 0 : index
    %7 = vector.load %arg6[%c0_6, %c0_7, %c0_8] : memref<1x32x256xf32, #tpu.memory_space<vmem>>, vector<1x32x256xf32>
    %8 = vector.shape_cast %7 : vector<1x32x256xf32> to vector<32x256xf32>
    %9 = vector.shape_cast %6 : vector<32x256xf32> to vector<1x32x256xf32>
    tpu.vector_store %arg6[%c0_6, %c0_7, %c0_8], %9 {strides = array<i32>} : memref<1x32x256xf32, #tpu.memory_space<vmem>>, vector<1x32x256xf32>,
    return
  }
  func.func @transform_0(%arg0: i32, %arg1: i32, %arg2: i32) -> (i32, i32, i32) {
    %c0_i32 = arith.constant 0 : i32
    %c0_i32_0 = arith.constant 0 : i32
    return %arg0, %c0_i32, %arg2 : i32, i32, i32
  }
  func.func @transform_1(%arg0: i32, %arg1: i32, %arg2: i32) -> (i32, i32) {
    %c0_i32 = arith.constant 0 : i32
    %c0_i32_0 = arith.constant 0 : i32
    return %arg1, %c0_i32 : i32, i32
  }
  func.func @transform_2(%arg0: i32, %arg1: i32, %arg2: i32) -> (i32, i32) {
    %c0_i32 = arith.constant 0 : i32
    %c0_i32_0 = arith.constant 0 : i32
    return %arg1, %c0_i32 : i32, i32
  }
  func.func @transform_3(%arg0: i32, %arg1: i32, %arg2: i32) -> (i32, i32, i32) {
    %c0_i32 = arith.constant 0 : i32
    return %arg0, %arg1, %arg2 : i32, i32, i32
  }
}

module attributes {stable_mosaic.version = 11 : i64} {
  func.func @_proj_cf_kernel(%arg0: i32, %arg1: i32, %arg2: i32, %arg3: memref<1x4x256xf32, #tpu.memory_space<vmem>>, %arg4: memref<32x4xf32, #tpu.memory_space<vmem>>, %arg5: memref<32x1xf32, #tpu.memory_space<vmem>>, %arg6: memref<1x32x256xf32, #tpu.memory_space<vmem>>) attributes {dimension_semantics = [#tpu.dimension_semantics<parallel>, #tpu.dimension_semantics<parallel>, #tpu.dimension_semantics<parallel>], iteration_bounds = array<i64: 2, 1, 1>, scalar_prefetch = 0 : i64, scratch_operands = 0 : i64, tpu.core_type = #tpu.core_type<tc>, window_params = [{transform_indices = @transform_0, window_bounds = array<i64: 1, 4, 256>}, {transform_indices = @transform_1, window_bounds = array<i64: 32, 4>}, {transform_indices = @transform_2, window_bounds = array<i64: 32, 1>}, {transform_indices = @transform_3, window_bounds = array<i64: 1, 32, 256>}]} {
    %c0 = arith.constant 0 : index
    %c0_0 = arith.constant 0 : index
    %0 = vector.load %arg4[%c0, %c0_0] : memref<32x4xf32, #tpu.memory_space<vmem>>, vector<32x4xf32>
    %c0_1 = arith.constant 0 : index
    %c0_2 = arith.constant 0 : index
    %c0_3 = arith.constant 0 : index
    %1 = vector.load %arg3[%c0_1, %c0_2, %c0_3] : memref<1x4x256xf32, #tpu.memory_space<vmem>>, vector<1x4x256xf32>
    %2 = vector.shape_cast %1 : vector<1x4x256xf32> to vector<4x256xf32>
    %cst = arith.constant dense<0.000000e+00> : vector<32x256xf32>
    %3 = tpu.matmul %0, %2, %cst {dimension_numbers = #tpu.dot_dimension_numbers<[1], [0], [0], [1], [0, 0, 1, 1], [], []>} : vector<32x4xf32>, vector<4x256xf32>, vector<32x256xf32> -> vector<32x256xf32>
    %c0_4 = arith.constant 0 : index
    %c0_5 = arith.constant 0 : index
    %4 = vector.load %arg5[%c0_4, %c0_5] : memref<32x1xf32, #tpu.memory_space<vmem>>, vector<32x1xf32>
    %5 = vector.broadcast %4 : vector<32x1xf32> to vector<32x256xf32>
    %6 = arith.addf %3, %5 : vector<32x256xf32>
    %c0_6 = arith.constant 0 : index
    %c0_7 = arith.constant 0 : index
    %c0_8 = arith.constant 0 : index
    %7 = vector.load %arg6[%c0_6, %c0_7, %c0_8] : memref<1x32x256xf32, #tpu.memory_space<vmem>>, vector<1x32x256xf32>
    %8 = vector.shape_cast %7 : vector<1x32x256xf32> to vector<32x256xf32>
    %9 = vector.shape_cast %6 : vector<32x256xf32> to vector<1x32x256xf32>
    tpu.vector_store %arg6[%c0_6, %c0_7, %c0_8], %9 {strides = array<i32>} : memref<1x32x256xf32, #tpu.memory_space<vmem>>, vector<1x32x256xf32>,
    return
  }
  func.func @transform_0(%arg0: i32, %arg1: i32, %arg2: i32) -> (i32, i32, i32) {
    %c0_i32 = arith.constant 0 : i32
    %c0_i32_0 = arith.constant 0 : i32
    return %arg0, %c0_i32, %arg2 : i32, i32, i32
  }
  func.func @transform_1(%arg0: i32, %arg1: i32, %arg2: i32) -> (i32, i32) {
    %c0_i32 = arith.constant 0 : i32
    %c0_i32_0 = arith.constant 0 : i32
    return %arg1, %c0_i32 : i32, i32
  }
  func.func @transform_2(%arg0: i32, %arg1: i32, %arg2: i32) -> (i32, i32) {
    %c0_i32 = arith.constant 0 : i32
    %c0_i32_0 = arith.constant 0 : i32
    return %arg1, %c0_i32 : i32, i32
  }
  func.func @transform_3(%arg0: i32, %arg1: i32, %arg2: i32) -> (i32, i32, i32) {
    %c0_i32 = arith.constant 0 : i32
    return %arg0, %arg1, %arg2 : i32, i32, i32
  }
}

</mosaic_0001>

<llo_original>
// kernel: tpu_custom_call.1
$region0: #{tpu_custom_call.1}
  #allocation0 [shape = 'u32[]', space=smem, size = 0x4, offset = 0x4, fixed_abs, tag = 'smem constant byte address 0x4 - core index']
  #allocation1 [shape = 'u32[144,128]{1,0:T(1,128)}', space=vmem, size = 0x12000, scoped, tag = 'internal scratch']
  %s0 = inlined_call_operand.vmem [shape: f32[2,4,256], index: 0, kind: input, shape index: {}]
  %s1 = inlined_call_operand.vmem [shape: f32[32,4], index: 1, kind: input, shape index: {}]
  %s2 = inlined_call_operand.vmem [shape: f32[32,1], index: 2, kind: input, shape index: {}]
  %s3 = inlined_call_operand.hbm [shape: f32[2,32,256], index: 3, kind: output, shape index: {}]
  %s4 = sld [smem:[#allocation0]]
  $region45: #{tpu_custom_call.1} parent=0
    _
  %s6 = ssub.s32 1, %s4
  %s7 = scalar_select 0, %s6, %s4
  $region1: #{tpu_custom_call.1} parent=0
    #allocation2 [shape = 'u8[65536]{0}', space=vmem, size = 0x10000, scoped, tag = 'output window, operand 0']
    #allocation3 [shape = 's32[2]{0}', space=sflag, size = 0x8, scoped, tag = 'scoped memory for tpu_custom_call.1']
    %8 = vsyncpa [#allocation3], 0
    %s9 = scalar_lea.sflag [#allocation3], 1
    %10 = vsyncpa %s9, 0
    loop: start=0, step=1, limit=4
    $region2: #{tpu_custom_call.1} parent=1 // loop_pre_header
      _
    $region3: #{tpu_custom_call.1} parent=1 // loop_header
      %s12 = sphi 0, %s16
      %p13 = scmp.ge.s32.totalorder %s12, 4
      %s19 = sphi 0, %s38
      %s20 = sphi 0, %s34
      %s21 = sphi 0, %s30
      %s22 = sphi 0, %s19
      %s23 = sphi 0, %s20
      %s24 = sphi 0, %s21
      %s25 = sphi 0, %s22
      %s26 = sphi 0, %s23
      %s27 = sphi 0, %s24
      %s43 = sphi 0, %s45
      %s46 = sphi 0, %s43
      %s47 = sphi 0, %s46
      %s63 = sphi 0, %s47
      %s69 = sphi 0, %s71
      %s72 = sphi 0, %s69
      %s73 = sphi 0, %s72
      %s89 = sphi 0, %s73
      %s95 = sphi 0, %s97
      %s98 = sphi 0, %s95
      %s99 = sphi 0, %s98
      %s115 = sphi 0, %s99
      %s125 = sphi 0, %s127
      %s128 = sphi 0, %s125
      %s129 = sphi 0, %s128
      %s145 = sphi 0, %s129
    $region4: #{tpu_custom_call.1} parent=1 // loop_header_branch
      %15 = sbr.rel (%p13) target = $region8
    $region5: #{tpu_custom_call.1} parent=1 // loop_body
      %s17 = ssub.s32 %s12, 1
      %s18 = ssub.s32 %s12, 2
      %s28 = sadd.s32 1, %s21
      %p29 = scmp.ge.s32.totalorder %s28, 1
      %s30 = scalar_select %p29, 0, %s28
      %s31 = sadd.s32 1, %s20
      %s32 = scalar_select %p29, %s31, %s20
      %p33 = scmp.ge.s32.totalorder %s32, 1
      %s34 = scalar_select %p33, 0, %s32
      %s35 = sadd.s32 1, %s19
      %s36 = scalar_select %p33, %s35, %s19
      %p37 = scmp.ge.s32.totalorder %s36, 2
      %s38 = scalar_select %p37, 0, %s36
      %s39 = ssub.s32 %s19, %s38
      %s40 = ssub.s32 %s21, %s30
      %s41 = sor.u32 %s39, %s40
      %p42 = scmp.eq.s32.totalorder %s41, 0
      %s44 = sadd.s32 %s43, 1
      %s45 = scalar_select %p42, %s43, %s44
      %p48 = pneg %p42
      %p49 = scmp.eq.s32.totalorder %s12, 1
      %p50 = por %p48, %p49
      %p51 = scmp.ne.s32.totalorder %s43, %s46
      %p52 = scmp.eq.s32.totalorder %s12, 0
      %p53 = por %p51, %p52
      %p54 = scmp.ne.s32.totalorder %s43, %s46
      %p55 = scmp.eq.s32.totalorder %s17, 1
      %p56 = por %p54, %p55
      %p57 = scmp.ne.s32.totalorder %s46, %s47
      %p58 = scmp.eq.s32.totalorder %s17, 0
      %p59 = por %p57, %p58
      %p60 = scmp.ne.s32.totalorder %s46, %s47
      %p61 = scmp.eq.s32.totalorder %s18, 1
      %p62 = por %p60, %p61
      %p64 = scmp.ne.s32.totalorder %s47, %s63
      %p65 = scmp.eq.s32.totalorder %s18, 0
      %p66 = por %p64, %p65
      %s67 = ssub.s32 %s20, %s34
      %p68 = scmp.eq.s32.totalorder %s67, 0
      %s70 = sadd.s32 %s69, 1
      %s71 = scalar_select %p68, %s69, %s70
      %p74 = pneg %p68
      %p75 = scmp.eq.s32.totalorder %s12, 1
      %p76 = por %p74, %p75
      %p77 = scmp.ne.s32.totalorder %s69, %s72
      %p78 = scmp.eq.s32.totalorder %s12, 0
      %p79 = por %p77, %p78
      %p80 = scmp.ne.s32.totalorder %s69, %s72
      %p81 = scmp.eq.s32.totalorder %s17, 1
      %p82 = por %p80, %p81
      %p83 = scmp.ne.s32.totalorder %s72, %s73
      %p84 = scmp.eq.s32.totalorder %s17, 0
      %p85 = por %p83, %p84
      %p86 = scmp.ne.s32.totalorder %s72, %s73
      %p87 = scmp.eq.s32.totalorder %s18, 1
      %p88 = por %p86, %p87
      %p90 = scmp.ne.s32.totalorder %s73, %s89
      %p91 = scmp.eq.s32.totalorder %s18, 0
      %p92 = por %p90, %p91
      %s93 = ssub.s32 %s20, %s34
      %p94 = scmp.eq.s32.totalorder %s93, 0
      %s96 = sadd.s32 %s95, 1
      %s97 = scalar_select %p94, %s95, %s96
      %p100 = pneg %p94
      %p101 = scmp.eq.s32.totalorder %s12, 1
      %p102 = por %p100, %p101
      %p103 = scmp.ne.s32.totalorder %s95, %s98
      %p104 = scmp.eq.s32.totalorder %s12, 0
      %p105 = por %p103, %p104
      %p106 = scmp.ne.s32.totalorder %s95, %s98
      %p107 = scmp.eq.s32.totalorder %s17, 1
      %p108 = por %p106, %p107
      %p109 = scmp.ne.s32.totalorder %s98, %s99
      %p110 = scmp.eq.s32.totalorder %s17, 0
      %p111 = por %p109, %p110
      %p112 = scmp.ne.s32.totalorder %s98, %s99
      %p113 = scmp.eq.s32.totalorder %s18, 1
      %p114 = por %p112, %p113
      %p116 = scmp.ne.s32.totalorder %s99, %s115
      %p117 = scmp.eq.s32.totalorder %s18, 0
      %p118 = por %p116, %p117
      %s119 = ssub.s32 %s19, %s38
      %s120 = ssub.s32 %s20, %s34
      %s121 = sor.u32 %s119, %s120
      %s122 = ssub.s32 %s21, %s30
      %s123 = sor.u32 %s121, %s122
      %p124 = scmp.eq.s32.totalorder %s123, 0
      %s126 = sadd.s32 %s125, 1
      %s127 = scalar_select %p124, %s125, %s126
      %p130 = pneg %p124
      %p131 = scmp.eq.s32.totalorder %s12, 1
      %p132 = por %p130, %p131
      %p133 = scmp.ne.s32.totalorder %s125, %s128
      %p134 = scmp.eq.s32.totalorder %s12, 0
      %p135 = por %p133, %p134
      %p136 = scmp.ne.s32.totalorder %s125, %s128
      %p137 = scmp.eq.s32.totalorder %s17, 1
      %p138 = por %p136, %p137
      %p139 = scmp.ne.s32.totalorder %s128, %s129
      %p140 = scmp.eq.s32.totalorder %s17, 0
      %p141 = por %p139, %p140
      %p142 = scmp.ne.s32.totalorder %s128, %s129
      %p143 = scmp.eq.s32.totalorder %s18, 1
      %p144 = por %p142, %p143
      %p146 = scmp.ne.s32.totalorder %s129, %s145
      %p147 = scmp.eq.s32.totalorder %s18, 0
      %p148 = por %p146, %p147
      %p149 = scmp.le.s32.totalorder 1, %s12
      %p150 = scmp.lt.s32.totalorder %s12, 3
      %p151 = pnand %p149, %p150
      %p152 = pneg %p151
      // Predicated region
      $region9: #{tpu_custom_call.1} parent=5 // pred_check
        _
      $region10: #{tpu_custom_call.1} parent=5 // pred_check_branch
        %154 = sbr.rel (%p151) target = $region12
      $region11: #{tpu_custom_call.1} parent=5 // pred_region
        %s155 = ssub.s32 %s12, 1
        // Predicated region
        $region13: #{tpu_custom_call.1} parent=11 // pred_check
          %p156 = pneg %p85
        $region14: #{tpu_custom_call.1} parent=11 // pred_check_branch
          %158 = sbr.rel (%p156) target = $region16
        $region15: #{tpu_custom_call.1} parent=11 // pred_region
          %s159 = smul.u32 4, %s23
          %p160 = scmp.lt.s32.totalorder %s159, 3
          %s161 = scalar_select %p160, %s159, 3
          %s162 = smul.addr %s161, 8
          %s163 = scalar_lea.vmem %s1, %s162
          %s164 = smul.u32 4, %s23
        $region16: #{tpu_custom_call.1} parent=11 // pred_fallthru
          _
        // Predicated region
        $region17: #{tpu_custom_call.1} parent=11 // pred_check
          %p165 = pneg %p111
        $region18: #{tpu_custom_call.1} parent=11 // pred_check_branch
          %167 = sbr.rel (%p165) target = $region20
        $region19: #{tpu_custom_call.1} parent=11 // pred_region
          %s168 = smul.u32 4, %s23
          %p169 = scmp.lt.s32.totalorder %s168, 3
          %s170 = scalar_select %p169, %s168, 3
          %s171 = smul.addr %s170, 8
          %s172 = scalar_lea.vmem %s2, %s171
          %s173 = smul.u32 4, %s23
        $region20: #{tpu_custom_call.1} parent=11 // pred_fallthru
          _
      $region12: #{tpu_custom_call.1} parent=5 // pred_fallthru
        _
      %p174 = scmp.lt.s32.totalorder %s12, 2
      // Predicated region
      $region21: #{tpu_custom_call.1} parent=5 // pred_check
        %p175 = pneg %p174
      $region22: #{tpu_custom_call.1} parent=5 // pred_check_branch
        %177 = sbr.rel (%p175) target = $region24
      $region23: #{tpu_custom_call.1} parent=5 // pred_region
        // Predicated region
        $region25: #{tpu_custom_call.1} parent=23 // pred_check
          %p178 = pneg %p53
        $region26: #{tpu_custom_call.1} parent=23 // pred_check_branch
          %180 = sbr.rel (%p178) target = $region28
        $region27: #{tpu_custom_call.1} parent=23 // pred_region
          %s181 = smul.u32 2, %s21
          %p182 = scmp.lt.s32.totalorder %s19, 1
          %s183 = scalar_select %p182, %s19, 1
          %p184 = scmp.lt.s32.totalorder %s181, 1
          %s185 = scalar_select %p184, %s181, 1
          %s186 = smul.addr %s183, 2
          %s187 = sadd.s32 %s185, %s186
          %s188 = smul.addr %s187, 4
          %s189 = scalar_lea.vmem %s0, %s188
          %s190 = smul.u32 2, %s21
        $region28: #{tpu_custom_call.1} parent=23 // pred_fallthru
          _
      $region24: #{tpu_custom_call.1} parent=5 // pred_fallthru
        _
      %p191 = scmp.le.s32.totalorder 1, %s12
      %p192 = scmp.lt.s32.totalorder %s12, 3
      %p193 = pnand %p191, %p192
      %p194 = pneg %p193
      // Predicated region
      $region29: #{tpu_custom_call.1} parent=5 // pred_check
        _
      $region30: #{tpu_custom_call.1} parent=5 // pred_check_branch
        %196 = sbr.rel (%p193) target = $region32
      $region31: #{tpu_custom_call.1} parent=5 // pred_region
        %s197 = ssub.s32 %s12, 1
        %s198 = smul.u32 2, %s24
        %p199 = scmp.lt.s32.totalorder %s22, 1
        %s200 = scalar_select %p199, %s22, 1
        %p201 = scmp.lt.s32.totalorder %s198, 1
        %s202 = scalar_select %p201, %s198, 1
        %s203 = smul.addr %s200, 2
        %s204 = sadd.s32 %s202, %s203
        %s205 = smul.addr %s204, 4
        %s206 = scalar_lea.vmem %s0, %s205
        %p207 = pneg %p59
        %p208 = pneg %p56
        %s209 = smul.u32 4, %s23
        %p210 = scmp.lt.s32.totalorder %s209, 3
        %s211 = scalar_select %p210, %s209, 3
        %s212 = smul.addr %s211, 8
        %s213 = scalar_lea.vmem %s1, %s212
        %p214 = pneg %p85
        %p215 = pneg %p82
        %s216 = smul.u32 4, %s23
        %p217 = scmp.lt.s32.totalorder %s216, 3
        %s218 = scalar_select %p217, %s216, 3
        %s219 = smul.addr %s218, 8
        %s220 = scalar_lea.vmem %s2, %s219
        %p221 = pneg %p111
        %p222 = pneg %p108
        %p223 = pneg %p141
        %p224 = pneg %p138
        %s225 = sand.u32 %s128, 1
        %s226 = scalar_lea.sflag [#allocation3], %s225
        %s227 = sand.u32 %s128, 1
        %s228 = smul.addr %s227, 64
        %s229 = scalar_lea.vmem [#allocation2], %s228
        %s230 = smul.u32 2, %s24
        %p231 = scmp.lt.s32.totalorder %s22, 1
        %s232 = scalar_select %p231, %s22, 1
        %p233 = scmp.lt.s32.totalorder %s230, 1
        %s234 = scalar_select %p233, %s230, 1
        %s235 = smul.addr %s232, 2
        %s236 = sadd.s32 %s234, %s235
        %s237 = smul.addr %s236, 4
        %s238 = scalar_lea.vmem %s0, %s237
        %s239 = smul.u32 2, %s24
        %s240 = smul.u32 4, %s23
        %p241 = scmp.lt.s32.totalorder %s240, 3
        %s242 = scalar_select %p241, %s240, 3
        %s243 = smul.addr %s242, 8
        %s244 = scalar_lea.vmem %s1, %s243
        %s245 = smul.u32 4, %s23
        %s246 = smul.u32 4, %s23
        %p247 = scmp.lt.s32.totalorder %s246, 3
        %s248 = scalar_select %p247, %s246, 3
        %s249 = smul.addr %s248, 8
        %s250 = scalar_lea.vmem %s2, %s249
        %s251 = smul.u32 4, %s23
        %s252 = smul.u32 4, %s23
        %s253 = smul.u32 2, %s24
        %v254 = vld [vmem:[%s244] sm:$0xff]
        %v255 = vld [vmem:[%s244 + $0x8] sm:$0xff]
        %v256 = vld [vmem:[%s244 + $0x10] sm:$0xff]
        %v257 = vld [vmem:[%s244 + $0x18] sm:$0xff]
        %v258 = vld [vmem:[%s238] sm:$0xff]
        %v259 = vld [vmem:[%s250] sm:$0xff]
        %v260 = vld [vmem:[%s250 + $0x8] sm:$0xff]
        %v261 = vld [vmem:[%s250 + $0x10] sm:$0xff]
        %v262 = vld [vmem:[%s250 + $0x18] sm:$0xff]
        %264 = vset.pattern.permute.xlu0 0
        %265 = vperm.xlu0 %264, %v259
        %v266 = vpop.permute.xlu0 %265
        %269 = vset.pattern.permute.xlu0 0
        %270 = vperm.xlu0 %269, %v260
        %v271 = vpop.permute.xlu0 %270
        %274 = vset.pattern.permute.xlu0 0
        %275 = vperm.xlu0 %274, %v261
        %v276 = vpop.permute.xlu0 %275
        %279 = vset.pattern.permute.xlu0 0
        %280 = vperm.xlu0 %279, %v262
        %v281 = vpop.permute.xlu0 %280
        %v284 = vcombine.high %v258, %v258
        %vm285 = vcmask 31744
        %v287 = vsel %vm285, %v254, 0
        %v290 = vsel %vm285, %v255, 0
        %v293 = vsel %vm285, %v256, 0
        %v296 = vsel %vm285, %v257, 0
        %vm298 = vcmask 1043456
        %v299 = vsel %vm298, %v258, 0
        %v301 = vsel %vm298, %v284, 0
        %303 = vmatprep.subr.mxu0 %v301
        %304 = vmatpush1.msra.mxu0 %v299
        %305 = vmatprep.subr.mxu0 0.0
        %306 = vmatpush1.msra.mxu0 0.0
        %307 = vmatprep.subr.mxu0 0.0
        %308 = vmatpush1.msra.mxu0 0.0
        %309 = vmatprep.subr.mxu0 0.0
        %310 = vmatpush1.msra.mxu0 0.0
        %311 = vmatprep.subr.mxu0 0.0
        %312 = vmatpush1.msra.mxu0 0.0
        %313 = vmatprep.subr.mxu0 0.0
        %314 = vmatpush1.msra.mxu0 0.0
        %315 = vmatprep.subr.mxu0 0.0
        %316 = vmatpush1.msra.mxu0 0.0
        %317 = vmatprep.subr.mxu0 0.0
        %318 = vmatpush1.msra.mxu0 0.0
        %319 = vmatprep.subr.mxu0 0.0
        %320 = vmatpush1.msra.mxu0 0.0
        %321 = vmatprep.subr.mxu0 0.0
        %322 = vmatpush1.msra.mxu0 0.0
        %323 = vmatprep.subr.mxu0 0.0
        %324 = vmatpush1.msra.mxu0 0.0
        %325 = vmatprep.subr.mxu0 0.0
        %326 = vmatpush1.msra.mxu0 0.0
        %327 = vmatprep.subr.mxu0 0.0
        %328 = vmatpush1.msra.mxu0 0.0
        %329 = vmatprep.subr.mxu0 0.0
        %330 = vmatpush1.msra.mxu0 0.0
        %331 = vmatprep.subr.mxu0 0.0
        %332 = vmatpush1.msra.mxu0 0.0
        %333 = vmatprep.subr.mxu0 0.0
        %334 = vmatpush1.msra.mxu0 0.0
        %335 = vmatprep.subr.mxu0 0.0
        %336 = vmatpush1.msra.mxu0 0.0
        %337 = vmatprep.subr.mxu0 0.0
        %338 = vmatpush1.msra.mxu0 0.0
        %339 = vmatprep.subr.mxu0 0.0
        %340 = vmatpush1.msra.mxu0 0.0
        %341 = vmatprep.subr.mxu0 0.0
        %342 = vmatpush1.msra.mxu0 0.0
        %343 = vmatprep.subr.mxu0 0.0
        %344 = vmatpush1.msra.mxu0 0.0
        %345 = vmatprep.subr.mxu0 0.0
        %346 = vmatpush1.msra.mxu0 0.0
        %347 = vmatprep.subr.mxu0 0.0
        %348 = vmatpush1.msra.mxu0 0.0
        %349 = vmatprep.subr.mxu0 0.0
        %350 = vmatpush1.msra.mxu0 0.0
        %351 = vmatprep.subr.mxu0 0.0
        %352 = vmatpush1.msra.mxu0 0.0
        %353 = vmatprep.subr.mxu0 0.0
        %354 = vmatpush1.msra.mxu0 0.0
        %355 = vmatprep.subr.mxu0 0.0
        %356 = vmatpush1.msra.mxu0 0.0
        %357 = vmatprep.subr.mxu0 0.0
        %358 = vmatpush1.msra.mxu0 0.0
        %359 = vmatprep.subr.mxu0 0.0
        %360 = vmatpush1.msra.mxu0 0.0
        %361 = vmatprep.subr.mxu0 0.0
        %362 = vmatpush1.msra.mxu0 0.0
        %363 = vmatprep.subr.mxu0 0.0
        %364 = vmatpush1.msra.mxu0 0.0
        %365 = vmatprep.subr.mxu0 0.0
        %366 = vmatpush1.msra.mxu0 0.0
        %367 = vmatprep.mubr.f32.mxu0 0.0
        %368 = vmatmul.mubr.f32.gmra.mrb[0].mxu0 %v287
        %v369 = vpop.f32.mrb[0].mxu0
        %v370 = vadd.f32 %v266, %v369
        %v371 = vpop.f32.mrb[0].mxu0
        %v372 = vadd.f32 %v266, %v371
        %373 = vmatprep.mubr.f32.mxu0 0.0
        %374 = vmatmul.mubr.f32.gmra.mrb[0].mxu0 %v290
        %v375 = vpop.f32.mrb[0].mxu0
        %v376 = vadd.f32 %v271, %v375
        %v377 = vpop.f32.mrb[0].mxu0
        %v378 = vadd.f32 %v271, %v377
        %379 = vmatprep.mubr.f32.mxu0 0.0
        %380 = vmatmul.mubr.f32.gmra.mrb[0].mxu0 %v293
        %v381 = vpop.f32.mrb[0].mxu0
        %v382 = vadd.f32 %v276, %v381
        %v383 = vpop.f32.mrb[0].mxu0
        %v384 = vadd.f32 %v276, %v383
        %385 = vmatprep.mubr.f32.mxu0 0.0
        %386 = vmatmul.mubr.f32.gmra.mrb[0].mxu0 %v296
        %v387 = vpop.f32.mrb[0].mxu0
        %v388 = vadd.f32 %v281, %v387
        %v389 = vpop.f32.mrb[0].mxu0
        %v390 = vadd.f32 %v281, %v389
        %391 = vdwg.mxu0
        %392 = vst [vmem:[%s229] sm:$0xff] %v370
        %393 = vst [vmem:[%s229 + $0x8] sm:$0xff] %v372
        %394 = vst [vmem:[%s229 + $0x10] sm:$0xff] %v376
        %395 = vst [vmem:[%s229 + $0x18] sm:$0xff] %v378
        %396 = vst [vmem:[%s229 + $0x20] sm:$0xff] %v382
        %397 = vst [vmem:[%s229 + $0x28] sm:$0xff] %v384
        %398 = vst [vmem:[%s229 + $0x30] sm:$0xff] %v388
        %399 = vst [vmem:[%s229 + $0x38] sm:$0xff] %v390
        %s400 = sand.u32 %s128, 1
        %s401 = scalar_lea.sflag [#allocation3], %s400
        %s402 = sand.u32 %s128, 1
        %s403 = smul.addr %s402, 64
        %s404 = scalar_lea.vmem [#allocation2], %s403
        // Predicated region
        $region33: #{tpu_custom_call.1} parent=31 // pred_check
          %p405 = pneg %p138
        $region34: #{tpu_custom_call.1} parent=31 // pred_check_branch
          %407 = sbr.rel (%p405) target = $region36
        $region35: #{tpu_custom_call.1} parent=31 // pred_region
          %s408 = smul.u32 4, %s23
          %s409 = smul.u32 2, %s24
          %s411 = ssub.s32 1024, 1024
          %412 = vsyncadd %s401, %s411
          %s413 = smul.addr %s408, 2
          %s414 = sadd.s32 %s409, %s413
          %s415 = smul.addr %s22, 8
          %s416 = sadd.s32 %s414, %s415
          %s417 = smul.addr %s416, 128
          %s418 = scalar_lea.hbm %s3, %s417
          %s419 = sshll.u32 %s404, 4
          %s420 = int_to_ptr.vmem [resolvable:$true] %s419
          %425 = dma.vmem_to_hbm [thread:$0]  %s420, 1024, %s418, %s401, 256, 256, 16
        $region36: #{tpu_custom_call.1} parent=31 // pred_fallthru
          _
      $region32: #{tpu_custom_call.1} parent=5 // pred_fallthru
        _
      %p426 = scmp.le.s32.totalorder 2, %s12
      // Predicated region
      $region37: #{tpu_custom_call.1} parent=5 // pred_check
        %p427 = pneg %p426
      $region38: #{tpu_custom_call.1} parent=5 // pred_check_branch
        %429 = sbr.rel (%p427) target = $region40
      $region39: #{tpu_custom_call.1} parent=5 // pred_region
        %s430 = ssub.s32 %s12, 2
        // Predicated region
        $region41: #{tpu_custom_call.1} parent=39 // pred_check
          %p431 = pneg %p144
        $region42: #{tpu_custom_call.1} parent=39 // pred_check_branch
          %433 = sbr.rel (%p431) target = $region44
        $region43: #{tpu_custom_call.1} parent=39 // pred_region
          %s434 = sand.u32 %s129, 1
          %s435 = scalar_lea.sflag [#allocation3], %s434
          %s436 = sand.u32 %s129, 1
          %s437 = smul.addr %s436, 64
          %s438 = scalar_lea.vmem [#allocation2], %s437
          %439 = dma.done %s435, 1024
        $region44: #{tpu_custom_call.1} parent=39 // pred_fallthru
          _
      $region40: #{tpu_custom_call.1} parent=5 // pred_fallthru
        _
    $region6: #{tpu_custom_call.1} parent=1 // loop_footer
      %s16 = sadd.s32 1, %s12
    $region7: #{tpu_custom_call.1} parent=1 // loop_footer_branch
      %11 = sbr.rel target = $region3
    $region8: #{tpu_custom_call.1} parent=1 // loop_exit
      _
    %440 = vsyncpa [#allocation3], 1
    %s441 = scalar_lea.sflag [#allocation3], 1
    %442 = vsyncpa %s441, 1

// kernel: tpu_custom_call.1
$region0: #{tpu_custom_call.1}
  #allocation0 [shape = 'u32[]', space=smem, size = 0x4, offset = 0x4, fixed_abs, tag = 'smem constant byte address 0x4 - core index']
  #allocation1 [shape = 'u32[144,128]{1,0:T(1,128)}', space=vmem, size = 0x12000, scoped, tag = 'internal scratch']
  %s0 = inlined_call_operand.vmem [shape: f32[2,4,256], index: 0, kind: input, shape index: {}]
  %s1 = inlined_call_operand.vmem [shape: f32[32,4], index: 1, kind: input, shape index: {}]
  %s2 = inlined_call_operand.vmem [shape: f32[32,1], index: 2, kind: input, shape index: {}]
  %s3 = inlined_call_operand.hbm [shape: f32[2,32,256], index: 3, kind: output, shape index: {}]
  %s4 = sld [smem:[#allocation0]]
  $region45: #{tpu_custom_call.1} parent=0
    _
  %s6 = ssub.s32 1, %s4
  %s7 = scalar_select 0, %s6, %s4
  $region1: #{tpu_custom_call.1} parent=0
    #allocation2 [shape = 'u8[65536]{0}', space=vmem, size = 0x10000, scoped, tag = 'output window, operand 0']
    #allocation3 [shape = 's32[2]{0}', space=sflag, size = 0x8, scoped, tag = 'scoped memory for tpu_custom_call.1']
    %8 = vsyncpa [#allocation3], 0
    %s9 = scalar_lea.sflag [#allocation3], 1
    %10 = vsyncpa %s9, 0
    loop: start=0, step=1, limit=4
    $region2: #{tpu_custom_call.1} parent=1 // loop_pre_header
      _
    $region3: #{tpu_custom_call.1} parent=1 // loop_header
      %s12 = sphi 0, %s16
      %p13 = scmp.ge.s32.totalorder %s12, 4
      %s19 = sphi 0, %s38
      %s20 = sphi 0, %s34
      %s21 = sphi 0, %s30
      %s22 = sphi 0, %s19
      %s23 = sphi 0, %s20
      %s24 = sphi 0, %s21
      %s25 = sphi 0, %s22
      %s26 = sphi 0, %s23
      %s27 = sphi 0, %s24
      %s43 = sphi 0, %s45
      %s46 = sphi 0, %s43
      %s47 = sphi 0, %s46
      %s63 = sphi 0, %s47
      %s69 = sphi 0, %s71
      %s72 = sphi 0, %s69
      %s73 = sphi 0, %s72
      %s89 = sphi 0, %s73
      %s95 = sphi 0, %s97
      %s98 = sphi 0, %s95
      %s99 = sphi 0, %s98
      %s115 = sphi 0, %s99
      %s125 = sphi 0, %s127
      %s128 = sphi 0, %s125
      %s129 = sphi 0, %s128
      %s145 = sphi 0, %s129
    $region4: #{tpu_custom_call.1} parent=1 // loop_header_branch
      %15 = sbr.rel (%p13) target = $region8
    $region5: #{tpu_custom_call.1} parent=1 // loop_body
      %s17 = ssub.s32 %s12, 1
      %s18 = ssub.s32 %s12, 2
      %s28 = sadd.s32 1, %s21
      %p29 = scmp.ge.s32.totalorder %s28, 1
      %s30 = scalar_select %p29, 0, %s28
      %s31 = sadd.s32 1, %s20
      %s32 = scalar_select %p29, %s31, %s20
      %p33 = scmp.ge.s32.totalorder %s32, 1
      %s34 = scalar_select %p33, 0, %s32
      %s35 = sadd.s32 1, %s19
      %s36 = scalar_select %p33, %s35, %s19
      %p37 = scmp.ge.s32.totalorder %s36, 2
      %s38 = scalar_select %p37, 0, %s36
      %s39 = ssub.s32 %s19, %s38
      %s40 = ssub.s32 %s21, %s30
      %s41 = sor.u32 %s39, %s40
      %p42 = scmp.eq.s32.totalorder %s41, 0
      %s44 = sadd.s32 %s43, 1
      %s45 = scalar_select %p42, %s43, %s44
      %p48 = pneg %p42
      %p49 = scmp.eq.s32.totalorder %s12, 1
      %p50 = por %p48, %p49
      %p51 = scmp.ne.s32.totalorder %s43, %s46
      %p52 = scmp.eq.s32.totalorder %s12, 0
      %p53 = por %p51, %p52
      %p54 = scmp.ne.s32.totalorder %s43, %s46
      %p55 = scmp.eq.s32.totalorder %s17, 1
      %p56 = por %p54, %p55
      %p57 = scmp.ne.s32.totalorder %s46, %s47
      %p58 = scmp.eq.s32.totalorder %s17, 0
      %p59 = por %p57, %p58
      %p60 = scmp.ne.s32.totalorder %s46, %s47
      %p61 = scmp.eq.s32.totalorder %s18, 1
      %p62 = por %p60, %p61
      %p64 = scmp.ne.s32.totalorder %s47, %s63
      %p65 = scmp.eq.s32.totalorder %s18, 0
      %p66 = por %p64, %p65
      %s67 = ssub.s32 %s20, %s34
      %p68 = scmp.eq.s32.totalorder %s67, 0
      %s70 = sadd.s32 %s69, 1
      %s71 = scalar_select %p68, %s69, %s70
      %p74 = pneg %p68
      %p75 = scmp.eq.s32.totalorder %s12, 1
      %p76 = por %p74, %p75
      %p77 = scmp.ne.s32.totalorder %s69, %s72
      %p78 = scmp.eq.s32.totalorder %s12, 0
      %p79 = por %p77, %p78
      %p80 = scmp.ne.s32.totalorder %s69, %s72
      %p81 = scmp.eq.s32.totalorder %s17, 1
      %p82 = por %p80, %p81
      %p83 = scmp.ne.s32.totalorder %s72, %s73
      %p84 = scmp.eq.s32.totalorder %s17, 0
      %p85 = por %p83, %p84
      %p86 = scmp.ne.s32.totalorder %s72, %s73
      %p87 = scmp.eq.s32.totalorder %s18, 1
      %p88 = por %p86, %p87
      %p90 = scmp.ne.s32.totalorder %s73, %s89
      %p91 = scmp.eq.s32.totalorder %s18, 0
      %p92 = por %p90, %p91
      %s93 = ssub.s32 %s20, %s34
      %p94 = scmp.eq.s32.totalorder %s93, 0
      %s96 = sadd.s32 %s95, 1
      %s97 = scalar_select %p94, %s95, %s96
      %p100 = pneg %p94
      %p101 = scmp.eq.s32.totalorder %s12, 1
      %p102 = por %p100, %p101
      %p103 = scmp.ne.s32.totalorder %s95, %s98
      %p104 = scmp.eq.s32.totalorder %s12, 0
      %p105 = por %p103, %p104
      %p106 = scmp.ne.s32.totalorder %s95, %s98
      %p107 = scmp.eq.s32.totalorder %s17, 1
      %p108 = por %p106, %p107
      %p109 = scmp.ne.s32.totalorder %s98, %s99
      %p110 = scmp.eq.s32.totalorder %s17, 0
      %p111 = por %p109, %p110
      %p112 = scmp.ne.s32.totalorder %s98, %s99
      %p113 = scmp.eq.s32.totalorder %s18, 1
      %p114 = por %p112, %p113
      %p116 = scmp.ne.s32.totalorder %s99, %s115
      %p117 = scmp.eq.s32.totalorder %s18, 0
      %p118 = por %p116, %p117
      %s119 = ssub.s32 %s19, %s38
      %s120 = ssub.s32 %s20, %s34
      %s121 = sor.u32 %s119, %s120
      %s122 = ssub.s32 %s21, %s30
      %s123 = sor.u32 %s121, %s122
      %p124 = scmp.eq.s32.totalorder %s123, 0
      %s126 = sadd.s32 %s125, 1
      %s127 = scalar_select %p124, %s125, %s126
      %p130 = pneg %p124
      %p131 = scmp.eq.s32.totalorder %s12, 1
      %p132 = por %p130, %p131
      %p133 = scmp.ne.s32.totalorder %s125, %s128
      %p134 = scmp.eq.s32.totalorder %s12, 0
      %p135 = por %p133, %p134
      %p136 = scmp.ne.s32.totalorder %s125, %s128
      %p137 = scmp.eq.s32.totalorder %s17, 1
      %p138 = por %p136, %p137
      %p139 = scmp.ne.s32.totalorder %s128, %s129
      %p140 = scmp.eq.s32.totalorder %s17, 0
      %p141 = por %p139, %p140
      %p142 = scmp.ne.s32.totalorder %s128, %s129
      %p143 = scmp.eq.s32.totalorder %s18, 1
      %p144 = por %p142, %p143
      %p146 = scmp.ne.s32.totalorder %s129, %s145
      %p147 = scmp.eq.s32.totalorder %s18, 0
      %p148 = por %p146, %p147
      %p149 = scmp.le.s32.totalorder 1, %s12
      %p150 = scmp.lt.s32.totalorder %s12, 3
      %p151 = pnand %p149, %p150
      %p152 = pneg %p151
      // Predicated region
      $region9: #{tpu_custom_call.1} parent=5 // pred_check
        _
      $region10: #{tpu_custom_call.1} parent=5 // pred_check_branch
        %154 = sbr.rel (%p151) target = $region12
      $region11: #{tpu_custom_call.1} parent=5 // pred_region
        %s155 = ssub.s32 %s12, 1
        // Predicated region
        $region13: #{tpu_custom_call.1} parent=11 // pred_check
          %p156 = pneg %p85
        $region14: #{tpu_custom_call.1} parent=11 // pred_check_branch
          %158 = sbr.rel (%p156) target = $region16
        $region15: #{tpu_custom_call.1} parent=11 // pred_region
          %s159 = smul.u32 4, %s23
          %p160 = scmp.lt.s32.totalorder %s159, 3
          %s161 = scalar_select %p160, %s159, 3
          %s162 = smul.addr %s161, 8
          %s163 = scalar_lea.vmem %s1, %s162
          %s164 = smul.u32 4, %s23
        $region16: #{tpu_custom_call.1} parent=11 // pred_fallthru
          _
        // Predicated region
        $region17: #{tpu_custom_call.1} parent=11 // pred_check
          %p165 = pneg %p111
        $region18: #{tpu_custom_call.1} parent=11 // pred_check_branch
          %167 = sbr.rel (%p165) target = $region20
        $region19: #{tpu_custom_call.1} parent=11 // pred_region
          %s168 = smul.u32 4, %s23
          %p169 = scmp.lt.s32.totalorder %s168, 3
          %s170 = scalar_select %p169, %s168, 3
          %s171 = smul.addr %s170, 8
          %s172 = scalar_lea.vmem %s2, %s171
          %s173 = smul.u32 4, %s23
        $region20: #{tpu_custom_call.1} parent=11 // pred_fallthru
          _
      $region12: #{tpu_custom_call.1} parent=5 // pred_fallthru
        _
      %p174 = scmp.lt.s32.totalorder %s12, 2
      // Predicated region
      $region21: #{tpu_custom_call.1} parent=5 // pred_check
        %p175 = pneg %p174
      $region22: #{tpu_custom_call.1} parent=5 // pred_check_branch
        %177 = sbr.rel (%p175) target = $region24
      $region23: #{tpu_custom_call.1} parent=5 // pred_region
        // Predicated region
        $region25: #{tpu_custom_call.1} parent=23 // pred_check
          %p178 = pneg %p53
        $region26: #{tpu_custom_call.1} parent=23 // pred_check_branch
          %180 = sbr.rel (%p178) target = $region28
        $region27: #{tpu_custom_call.1} parent=23 // pred_region
          %s181 = smul.u32 2, %s21
          %p182 = scmp.lt.s32.totalorder %s19, 1
          %s183 = scalar_select %p182, %s19, 1
          %p184 = scmp.lt.s32.totalorder %s181, 1
          %s185 = scalar_select %p184, %s181, 1
          %s186 = smul.addr %s183, 2
          %s187 = sadd.s32 %s185, %s186
          %s188 = smul.addr %s187, 4
          %s189 = scalar_lea.vmem %s0, %s188
          %s190 = smul.u32 2, %s21
        $region28: #{tpu_custom_call.1} parent=23 // pred_fallthru
          _
      $region24: #{tpu_custom_call.1} parent=5 // pred_fallthru
        _
      %p191 = scmp.le.s32.totalorder 1, %s12
      %p192 = scmp.lt.s32.totalorder %s12, 3
      %p193 = pnand %p191, %p192
      %p194 = pneg %p193
      // Predicated region
      $region29: #{tpu_custom_call.1} parent=5 // pred_check
        _
      $region30: #{tpu_custom_call.1} parent=5 // pred_check_branch
        %196 = sbr.rel (%p193) target = $region32
      $region31: #{tpu_custom_call.1} parent=5 // pred_region
        %s197 = ssub.s32 %s12, 1
        %s198 = smul.u32 2, %s24
        %p199 = scmp.lt.s32.totalorder %s22, 1
        %s200 = scalar_select %p199, %s22, 1
        %p201 = scmp.lt.s32.totalorder %s198, 1
        %s202 = scalar_select %p201, %s198, 1
        %s203 = smul.addr %s200, 2
        %s204 = sadd.s32 %s202, %s203
        %s205 = smul.addr %s204, 4
        %s206 = scalar_lea.vmem %s0, %s205
        %p207 = pneg %p59
        %p208 = pneg %p56
        %s209 = smul.u32 4, %s23
        %p210 = scmp.lt.s32.totalorder %s209, 3
        %s211 = scalar_select %p210, %s209, 3
        %s212 = smul.addr %s211, 8
        %s213 = scalar_lea.vmem %s1, %s212
        %p214 = pneg %p85
        %p215 = pneg %p82
        %s216 = smul.u32 4, %s23
        %p217 = scmp.lt.s32.totalorder %s216, 3
        %s218 = scalar_select %p217, %s216, 3
        %s219 = smul.addr %s218, 8
        %s220 = scalar_lea.vmem %s2, %s219
        %p221 = pneg %p111
        %p222 = pneg %p108
        %p223 = pneg %p141
        %p224 = pneg %p138
        %s225 = sand.u32 %s128, 1
        %s226 = scalar_lea.sflag [#allocation3], %s225
        %s227 = sand.u32 %s128, 1
        %s228 = smul.addr %s227, 64
        %s229 = scalar_lea.vmem [#allocation2], %s228
        %s230 = smul.u32 2, %s24
        %p231 = scmp.lt.s32.totalorder %s22, 1
        %s232 = scalar_select %p231, %s22, 1
        %p233 = scmp.lt.s32.totalorder %s230, 1
        %s234 = scalar_select %p233, %s230, 1
        %s235 = smul.addr %s232, 2
        %s236 = sadd.s32 %s234, %s235
        %s237 = smul.addr %s236, 4
        %s238 = scalar_lea.vmem %s0, %s237
        %s239 = smul.u32 2, %s24
        %s240 = smul.u32 4, %s23
        %p241 = scmp.lt.s32.totalorder %s240, 3
        %s242 = scalar_select %p241, %s240, 3
        %s243 = smul.addr %s242, 8
        %s244 = scalar_lea.vmem %s1, %s243
        %s245 = smul.u32 4, %s23
        %s246 = smul.u32 4, %s23
        %p247 = scmp.lt.s32.totalorder %s246, 3
        %s248 = scalar_select %p247, %s246, 3
        %s249 = smul.addr %s248, 8
        %s250 = scalar_lea.vmem %s2, %s249
        %s251 = smul.u32 4, %s23
        %s252 = smul.u32 4, %s23
        %s253 = smul.u32 2, %s24
        %v254 = vld [vmem:[%s244] sm:$0xff]
        %v255 = vld [vmem:[%s244 + $0x8] sm:$0xff]
        %v256 = vld [vmem:[%s244 + $0x10] sm:$0xff]
        %v257 = vld [vmem:[%s244 + $0x18] sm:$0xff]
        %v258 = vld [vmem:[%s238] sm:$0xff]
        %v259 = vld [vmem:[%s250] sm:$0xff]
        %v260 = vld [vmem:[%s250 + $0x8] sm:$0xff]
        %v261 = vld [vmem:[%s250 + $0x10] sm:$0xff]
        %v262 = vld [vmem:[%s250 + $0x18] sm:$0xff]
        %264 = vset.pattern.permute.xlu0 0
        %265 = vperm.xlu0 %264, %v259
        %v266 = vpop.permute.xlu0 %265
        %269 = vset.pattern.permute.xlu0 0
        %270 = vperm.xlu0 %269, %v260
        %v271 = vpop.permute.xlu0 %270
        %274 = vset.pattern.permute.xlu0 0
        %275 = vperm.xlu0 %274, %v261
        %v276 = vpop.permute.xlu0 %275
        %279 = vset.pattern.permute.xlu0 0
        %280 = vperm.xlu0 %279, %v262
        %v281 = vpop.permute.xlu0 %280
        %v284 = vcombine.high %v258, %v258
        %vm285 = vcmask 31744
        %v287 = vsel %vm285, %v254, 0
        %v290 = vsel %vm285, %v255, 0
        %v293 = vsel %vm285, %v256, 0
        %v296 = vsel %vm285, %v257, 0
        %vm298 = vcmask 1043456
        %v299 = vsel %vm298, %v258, 0
        %v301 = vsel %vm298, %v284, 0
        %303 = vmatprep.subr.mxu0 %v301
        %304 = vmatpush1.msra.mxu0 %v299
        %305 = vmatprep.subr.mxu0 0.0
        %306 = vmatpush1.msra.mxu0 0.0
        %307 = vmatprep.subr.mxu0 0.0
        %308 = vmatpush1.msra.mxu0 0.0
        %309 = vmatprep.subr.mxu0 0.0
        %310 = vmatpush1.msra.mxu0 0.0
        %311 = vmatprep.subr.mxu0 0.0
        %312 = vmatpush1.msra.mxu0 0.0
        %313 = vmatprep.subr.mxu0 0.0
        %314 = vmatpush1.msra.mxu0 0.0
        %315 = vmatprep.subr.mxu0 0.0
        %316 = vmatpush1.msra.mxu0 0.0
        %317 = vmatprep.subr.mxu0 0.0
        %318 = vmatpush1.msra.mxu0 0.0
        %319 = vmatprep.subr.mxu0 0.0
        %320 = vmatpush1.msra.mxu0 0.0
        %321 = vmatprep.subr.mxu0 0.0
        %322 = vmatpush1.msra.mxu0 0.0
        %323 = vmatprep.subr.mxu0 0.0
        %324 = vmatpush1.msra.mxu0 0.0
        %325 = vmatprep.subr.mxu0 0.0
        %326 = vmatpush1.msra.mxu0 0.0
        %327 = vmatprep.subr.mxu0 0.0
        %328 = vmatpush1.msra.mxu0 0.0
        %329 = vmatprep.subr.mxu0 0.0
        %330 = vmatpush1.msra.mxu0 0.0
        %331 = vmatprep.subr.mxu0 0.0
        %332 = vmatpush1.msra.mxu0 0.0
        %333 = vmatprep.subr.mxu0 0.0
        %334 = vmatpush1.msra.mxu0 0.0
        %335 = vmatprep.subr.mxu0 0.0
        %336 = vmatpush1.msra.mxu0 0.0
        %337 = vmatprep.subr.mxu0 0.0
        %338 = vmatpush1.msra.mxu0 0.0
        %339 = vmatprep.subr.mxu0 0.0
        %340 = vmatpush1.msra.mxu0 0.0
        %341 = vmatprep.subr.mxu0 0.0
        %342 = vmatpush1.msra.mxu0 0.0
        %343 = vmatprep.subr.mxu0 0.0
        %344 = vmatpush1.msra.mxu0 0.0
        %345 = vmatprep.subr.mxu0 0.0
        %346 = vmatpush1.msra.mxu0 0.0
        %347 = vmatprep.subr.mxu0 0.0
        %348 = vmatpush1.msra.mxu0 0.0
        %349 = vmatprep.subr.mxu0 0.0
        %350 = vmatpush1.msra.mxu0 0.0
        %351 = vmatprep.subr.mxu0 0.0
        %352 = vmatpush1.msra.mxu0 0.0
        %353 = vmatprep.subr.mxu0 0.0
        %354 = vmatpush1.msra.mxu0 0.0
        %355 = vmatprep.subr.mxu0 0.0
        %356 = vmatpush1.msra.mxu0 0.0
        %357 = vmatprep.subr.mxu0 0.0
        %358 = vmatpush1.msra.mxu0 0.0
        %359 = vmatprep.subr.mxu0 0.0
        %360 = vmatpush1.msra.mxu0 0.0
        %361 = vmatprep.subr.mxu0 0.0
        %362 = vmatpush1.msra.mxu0 0.0
        %363 = vmatprep.subr.mxu0 0.0
        %364 = vmatpush1.msra.mxu0 0.0
        %365 = vmatprep.subr.mxu0 0.0
        %366 = vmatpush1.msra.mxu0 0.0
        %367 = vmatprep.mubr.f32.mxu0 0.0
        %368 = vmatmul.mubr.f32.gmra.mrb[0].mxu0 %v287
        %v369 = vpop.f32.mrb[0].mxu0
        %v370 = vadd.f32 %v266, %v369
        %v371 = vpop.f32.mrb[0].mxu0
        %v372 = vadd.f32 %v266, %v371
        %373 = vmatprep.mubr.f32.mxu0 0.0
        %374 = vmatmul.mubr.f32.gmra.mrb[0].mxu0 %v290
        %v375 = vpop.f32.mrb[0].mxu0
        %v376 = vadd.f32 %v271, %v375
        %v377 = vpop.f32.mrb[0].mxu0
        %v378 = vadd.f32 %v271, %v377
        %379 = vmatprep.mubr.f32.mxu0 0.0
        %380 = vmatmul.mubr.f32.gmra.mrb[0].mxu0 %v293
        %v381 = vpop.f32.mrb[0].mxu0
        %v382 = vadd.f32 %v276, %v381
        %v383 = vpop.f32.mrb[0].mxu0
        %v384 = vadd.f32 %v276, %v383
        %385 = vmatprep.mubr.f32.mxu0 0.0
        %386 = vmatmul.mubr.f32.gmra.mrb[0].mxu0 %v296
        %v387 = vpop.f32.mrb[0].mxu0
        %v388 = vadd.f32 %v281, %v387
        %v389 = vpop.f32.mrb[0].mxu0
        %v390 = vadd.f32 %v281, %v389
        %391 = vdwg.mxu0
        %392 = vst [vmem:[%s229] sm:$0xff] %v370
        %393 = vst [vmem:[%s229 + $0x8] sm:$0xff] %v372
        %394 = vst [vmem:[%s229 + $0x10] sm:$0xff] %v376
        %395 = vst [vmem:[%s229 + $0x18] sm:$0xff] %v378
        %396 = vst [vmem:[%s229 + $0x20] sm:$0xff] %v382
        %397 = vst [vmem:[%s229 + $0x28] sm:$0xff] %v384
        %398 = vst [vmem:[%s229 + $0x30] sm:$0xff] %v388
        %399 = vst [vmem:[%s229 + $0x38] sm:$0xff] %v390
        %s400 = sand.u32 %s128, 1
        %s401 = scalar_lea.sflag [#allocation3], %s400
        %s402 = sand.u32 %s128, 1
        %s403 = smul.addr %s402, 64
        %s404 = scalar_lea.vmem [#allocation2], %s403
        // Predicated region
        $region33: #{tpu_custom_call.1} parent=31 // pred_check
          %p405 = pneg %p138
        $region34: #{tpu_custom_call.1} parent=31 // pred_check_branch
          %407 = sbr.rel (%p405) target = $region36
        $region35: #{tpu_custom_call.1} parent=31 // pred_region
          %s408 = smul.u32 4, %s23
          %s409 = smul.u32 2, %s24
          %s411 = ssub.s32 1024, 1024
          %412 = vsyncadd %s401, %s411
          %s413 = smul.addr %s408, 2
          %s414 = sadd.s32 %s409, %s413
          %s415 = smul.addr %s22, 8
          %s416 = sadd.s32 %s414, %s415
          %s417 = smul.addr %s416, 128
          %s418 = scalar_lea.hbm %s3, %s417
          %s419 = sshll.u32 %s404, 4
          %s420 = int_to_ptr.vmem [resolvable:$true] %s419
          %425 = dma.vmem_to_hbm [thread:$0]  %s420, 1024, %s418, %s401, 256, 256, 16
        $region36: #{tpu_custom_call.1} parent=31 // pred_fallthru
          _
      $region32: #{tpu_custom_call.1} parent=5 // pred_fallthru
        _
      %p426 = scmp.le.s32.totalorder 2, %s12
      // Predicated region
      $region37: #{tpu_custom_call.1} parent=5 // pred_check
        %p427 = pneg %p426
      $region38: #{tpu_custom_call.1} parent=5 // pred_check_branch
        %429 = sbr.rel (%p427) target = $region40
      $region39: #{tpu_custom_call.1} parent=5 // pred_region
        %s430 = ssub.s32 %s12, 2
        // Predicated region
        $region41: #{tpu_custom_call.1} parent=39 // pred_check
          %p431 = pneg %p144
        $region42: #{tpu_custom_call.1} parent=39 // pred_check_branch
          %433 = sbr.rel (%p431) target = $region44
        $region43: #{tpu_custom_call.1} parent=39 // pred_region
          %s434 = sand.u32 %s129, 1
          %s435 = scalar_lea.sflag [#allocation3], %s434
          %s436 = sand.u32 %s129, 1
          %s437 = smul.addr %s436, 64
          %s438 = scalar_lea.vmem [#allocation2], %s437
          %439 = dma.done %s435, 1024
        $region44: #{tpu_custom_call.1} parent=39 // pred_fallthru
          _
      $region40: #{tpu_custom_call.1} parent=5 // pred_fallthru
        _
    $region6: #{tpu_custom_call.1} parent=1 // loop_footer
      %s16 = sadd.s32 1, %s12
    $region7: #{tpu_custom_call.1} parent=1 // loop_footer_branch
      %11 = sbr.rel target = $region3
    $region8: #{tpu_custom_call.1} parent=1 // loop_exit
      _
    %440 = vsyncpa [#allocation3], 1
    %s441 = scalar_lea.sflag [#allocation3], 1
    %442 = vsyncpa %s441, 1

</llo_original>
